<compile_context>
chip_gen: v6e
topology: v6e:2x2x1
jax: 0.10.0
libtpu: 0.0.40
codegen_flags: <defaults>
</compile_context>

<pallas_src>
import jax
import jax.numpy as jnp
from jax import lax
from jax.experimental import pallas as pl
from jax.experimental.pallas import tpu as pltpu


def _round_up(x, m):
    return ((x + m - 1) // m) * m


def _silu(x):
    # x * sigmoid(x) with sigmoid(x) == 0.5 * tanh(0.5 * x) + 0.5 (exact).
    # One EUP op (tanh) per element; the extra mul/add ride the VPU slots.
    return x * (0.5 * jnp.tanh(0.5 * x) + 0.5)


def _vmem_limit_bytes():
    # Default scoped VMEM (16 MiB v5e / 32 MiB v6e,v7x) is too small for
    # tm=512 tiles at real ESM dims; raise it, leaving ~25% headroom.
    try:
        cap = pltpu.get_tpu_info().vmem_capacity_bytes
    except Exception:
        cap = 64 << 20  # conservative fallback (v7x physical VMEM)
    return int(min(cap * 3 // 4, 96 << 20))


def _choose_row_tile(n_rows, tm_max):
    # Small problems: one full block (rounded to a sublane multiple).
    if n_rows <= 128:
        return _round_up(n_rows, 8)
    # Otherwise a multiple of 128, capped at tm_max, and chosen so the grid
    # keeps >= 2 steps: the parallel grid axis is what feeds both v7x cores.
    largest_with_two_steps = max(128, ((n_rows - 1) // 128) * 128)
    return min(tm_max, largest_with_two_steps)


# ----------------------------------------------------------------------------
# Pallas kernel: fused 3-layer MLP head with SiLU activations
# ----------------------------------------------------------------------------
def _mlp_kernel(emb_ref, iedb_ref, w1e_ref, w1i_ref, b1_ref,
                w2_ref, b2_ref, w3_ref, b3_ref, o_ref):
    # ---- Layer 1: Linear(esm_dim + 2, H) + SiLU -----------------------------
    # (tm, esm_dim) @ (esm_dim, H) bf16 MXU matmul with f32 accumulation.  If
    # the backbone emitted f32, the per-tile cast below happens in VMEM and is
    # a no-op when the input is already bf16 (demo case).
    e = emb_ref[...]
    if e.dtype != jnp.bfloat16:
        e = e.astype(jnp.bfloat16)
    h1 = jnp.dot(e, w1e_ref[...],
                 preferred_element_type=jnp.float32)                 # (tm, H)
    # The two IEDB features enter as a cheap rank-2 VPU update (no host-side
    # concat):  x @ W1 == emb @ W1[:esm_dim] + iedb @ W1[esm_dim:].  The bias
    # is folded into the same expression.
    iedb = iedb_ref[...]                                             # (tm, 2)
    w1i = w1i_ref[...]                                               # (2, H)
    h1 = h1 + (b1_ref[...]
               + iedb[:, 0:1] * w1i[0:1, :]
               + iedb[:, 1:2] * w1i[1:2, :])
    h1 = _silu(h1)
    # Dropout -> identity in eval / no_grad inference semantics.
    h1 = h1.astype(jnp.bfloat16)          # feed the MXU natively for layer 2

    # ---- Layer 2: Linear(H, H // 2) + SiLU ----------------------------------
    h2 = jnp.dot(h1, w2_ref[...], preferred_element_type=jnp.float32)
    h2 = _silu(h2 + b2_ref[...])
    # Dropout -> identity.
    h2 = h2.astype(jnp.bfloat16)          # bf16 MXU for layer 3 as well

    # ---- Layer 3: Linear(H // 2, 1) -----------------------------------------
    # Contract (1, H2) with (tm, H2) along their last dims (same contraction
    # structure as q @ k^T), so the result is already a lane-dense (1, tm)
    # row: full-width stores instead of 1-lane-wide masked stores.
    out = lax.dot_general(w3_ref[...], h2, (((1,), (1,)), ((), ())),
                          preferred_element_type=jnp.float32)        # (1, tm)
    o_ref[...] = (out + b3_ref[0]).astype(o_ref.dtype)


def epitope_mlp_pallas(emb, iedb_emb, params, *, tm=512):
    """emb: (B, L, esm_dim), iedb_emb: (B, L, 2) -> (B, L, 1) float32."""
    w1, b1, w2, b2, w3, b3 = params
    B, L, esm_dim = emb.shape
    H = w1.shape[1]
    H2 = w2.shape[1]
    N = B * L

    # Flatten tokens.  The hot activation is streamed in its native dtype (the
    # stand-in backbone emits bf16); no standalone host-side cast of the big
    # tensor, which would add a full HBM read+write in the mem-bound regime.
    emb2 = emb.reshape(N, esm_dim)
    iedb2 = iedb_emb.reshape(N, 2).astype(jnp.float32)

    # Split W1 so no concatenated copy of the activations is ever materialized.
    w1_esm = w1[:esm_dim].astype(jnp.bfloat16)      # (esm_dim, H), MXU operand
    w1_iedb = w1[esm_dim:].astype(jnp.float32)      # (2, H), VPU rank-2 update
    w2_bf16 = w2.astype(jnp.bfloat16)               # (H, H2), MXU operand
    w3_bf16 = w3.reshape(1, H2).astype(jnp.bfloat16)

    # Row tile: large (multiple of 128) for real workloads, but keeping >= 2
    # grid steps when N allows so both v7x TensorCores get work; clamped for
    # tiny problems.  Ragged final blocks are handled by Pallas boundary
    # padding (garbage rows' outputs are sliced off below) -> no host jnp.pad.
    tm_eff = _choose_row_tile(N, tm)
    grid = pl.cdiv(N, tm_eff)
    assert grid == 1 or tm_eff % 128 == 0, "tm must be a multiple of 128"
    n_pad = grid * tm_eff

    out = pl.pallas_call(
        _mlp_kernel,
        out_shape=jax.ShapeDtypeStruct((1, n_pad), jnp.float32),
        grid_spec=pltpu.PrefetchScalarGridSpec(
            num_scalar_prefetch=0,
            grid=(grid,),
            in_specs=[
                pl.BlockSpec((tm_eff, esm_dim), lambda i: (i, 0)),   # emb rows
                pl.BlockSpec((tm_eff, 2), lambda i: (i, 0)),         # iedb rows
                pl.BlockSpec((esm_dim, H), lambda i: (0, 0)),        # W1[:esm]
                pl.BlockSpec((2, H), lambda i: (0, 0)),              # W1[esm:]
                pl.BlockSpec((1, H), lambda i: (0, 0)),              # b1
                pl.BlockSpec((H, H2), lambda i: (0, 0)),             # W2 (bf16)
                pl.BlockSpec((1, H2), lambda i: (0, 0)),             # b2
                pl.BlockSpec((1, H2), lambda i: (0, 0)),             # W3 row
                pl.BlockSpec(memory_space=pltpu.MemorySpace.SMEM),   # b3 scalar
            ],
            out_specs=pl.BlockSpec((1, tm_eff), lambda i: (0, i)),   # lane-dense
        ),
        compiler_params=pltpu.CompilerParams(
            dimension_semantics=("parallel",),
            vmem_limit_bytes=_vmem_limit_bytes()),
    )(emb2, iedb2, w1_esm, w1_iedb,
      b1.reshape(1, H).astype(jnp.float32),
      w2_bf16,
      b2.reshape(1, H2).astype(jnp.float32),
      w3_bf16,
      b3.reshape(1).astype(jnp.float32))

    return out.reshape(n_pad)[:N].reshape(B, L, 1)


# ----------------------------------------------------------------------------
# Deterministic parameter / stand-in ESM setup
# ----------------------------------------------------------------------------
def _linear_init(key, fan_in, fan_out):
    # Mimic torch.nn.Linear default init: U(-1/sqrt(fan_in), 1/sqrt(fan_in)).
    kw, kb = jax.random.split(key)
    bound = 1.0 / jnp.sqrt(fan_in)
    w = jax.random.uniform(kw, (fan_in, fan_out), jnp.float32, -bound, bound)
    b = jax.random.uniform(kb, (fan_out,), jnp.float32, -bound, bound)
    return w, b


def make_params(key, esm_dim, mlp_hidden_dim):
    k1, k2, k3 = jax.random.split(key, 3)
    w1, b1 = _linear_init(k1, esm_dim + 2, mlp_hidden_dim)
    w2, b2 = _linear_init(k2, mlp_hidden_dim, mlp_hidden_dim // 2)
    w3, b3 = _linear_init(k3, mlp_hidden_dim // 2, 1)
    return (w1, b1, w2, b2, w3, b3)


def epitope_prediction_forward(X_tokens, iedb_emb, esm_table, mlp_params):
    """Full forward: frozen "ESM" representation + Pallas MLP head."""
    # TODO(synk): the real frozen ESM transformer backbone has no clean Pallas
    # equivalent here; a deterministic embedding-table lookup stands in for
    # esm_model(X)['representations'][ll_idx] (frozen / no-grad, bf16 output).
    emb = jnp.take(esm_table, X_tokens, axis=0)     # (B, L, esm_dim)
    return epitope_mlp_pallas(emb, iedb_emb, mlp_params)


if __name__ == "__main__":
    # Small, deterministic example shapes.
    B, L = 2, 8            # batch, sequence length
    VOCAB = 33             # ESM-style alphabet size
    ESM_DIM = 32           # esm_dim
    MLP_HIDDEN = 32        # mlp_hidden_dim

    key = jax.random.PRNGKey(0)
    k_tok, k_iedb, k_tab, k_par = jax.random.split(key, 4)

    X_tokens = jax.random.randint(k_tok, (B, L), 0, VOCAB, dtype=jnp.int32)
    iedb_emb = jax.random.normal(k_iedb, (B, L, 2), dtype=jnp.float32)
    # Frozen backbone stand-in emits bf16 activations (matches kernel input).
    esm_table = jax.random.normal(
        k_tab, (VOCAB, ESM_DIM), dtype=jnp.float32).astype(jnp.bfloat16)
    mlp_params = make_params(k_par, ESM_DIM, MLP_HIDDEN)

    out = epitope_prediction_forward(X_tokens, iedb_emb, esm_table, mlp_params)
    out = jax.block_until_ready(out)
    assert out.shape == (B, L, 1), out.shape

    # Reference in plain JAX (eval-mode dropout = identity).  It mirrors the
    # kernel's mixed precision (bf16 MXU operands, f32 accumulation and f32
    # activations); the tanh-based sigmoid in the kernel is mathematically
    # identical to x*sigmoid(x), so only f32 rounding differences remain.
    # NOTE: the bf16 operands are a deliberate deviation from the f32 PyTorch
    # model's numerics (inference-grade, ~2^-8 relative on the matmul inputs).
    w1, b1, w2, b2, w3, b3 = mlp_params
    f32 = jnp.float32
    emb_ref = jnp.take(esm_table, X_tokens, axis=0).astype(f32)
    w1e_ref = w1[:ESM_DIM].astype(jnp.bfloat16).astype(f32)
    h1 = emb_ref @ w1e_ref + iedb_emb @ w1[ESM_DIM:] + b1
    h1 = h1 * jax.nn.sigmoid(h1)
    h1 = h1.astype(jnp.bfloat16).astype(f32)
    h2 = h1 @ w2.astype(jnp.bfloat16).astype(f32) + b2
    h2 = h2 * jax.nn.sigmoid(h2)
    h2 = h2.astype(jnp.bfloat16).astype(f32)
    ref = h2 @ w3.astype(jnp.bfloat16).astype(f32) + b3
    max_err = float(jnp.max(jnp.abs(out - ref)))
    assert jnp.allclose(out, ref, atol=2e-2, rtol=2e-2), max_err

    print("KERNEL_OK")
</pallas_src>

<mosaic_0001>
module attributes {stable_mosaic.version = 11 : i64} {
  func.func @_mlp_kernel(%arg0: i32, %arg1: memref<16x32xbf16, #tpu.memory_space<vmem>>, %arg2: memref<16x2xf32, #tpu.memory_space<vmem>>, %arg3: memref<32x32xbf16, #tpu.memory_space<vmem>>, %arg4: memref<2x32xf32, #tpu.memory_space<vmem>>, %arg5: memref<1x32xf32, #tpu.memory_space<vmem>>, %arg6: memref<32x16xbf16, #tpu.memory_space<vmem>>, %arg7: memref<1x16xf32, #tpu.memory_space<vmem>>, %arg8: memref<1x16xbf16, #tpu.memory_space<vmem>>, %arg9: memref<1xf32, #tpu.memory_space<smem>>, %arg10: memref<1x16xf32, #tpu.memory_space<vmem>>) attributes {dimension_semantics = [#tpu.dimension_semantics<parallel>], iteration_bounds = array<i64: 1>, scalar_prefetch = 0 : i64, scratch_operands = 0 : i64, tpu.core_type = #tpu.core_type<tc>, window_params = [{transform_indices = @transform_0, window_bounds = array<i64: 16, 32>}, {transform_indices = @transform_1, window_bounds = array<i64: 16, 2>}, {pipeline_mode = #tpu.pipeline_mode<synchronous>, transform_indices = @transform_2, window_bounds = array<i64: 32, 32>}, {pipeline_mode = #tpu.pipeline_mode<synchronous>, transform_indices = @transform_3, window_bounds = array<i64: 2, 32>}, {pipeline_mode = #tpu.pipeline_mode<synchronous>, transform_indices = @transform_4, window_bounds = array<i64: 1, 32>}, {pipeline_mode = #tpu.pipeline_mode<synchronous>, transform_indices = @transform_5, window_bounds = array<i64: 32, 16>}, {pipeline_mode = #tpu.pipeline_mode<synchronous>, transform_indices = @transform_6, window_bounds = array<i64: 1, 16>}, {pipeline_mode = #tpu.pipeline_mode<synchronous>, transform_indices = @transform_7, window_bounds = array<i64: 1, 16>}, {transform_indices = @transform_8, window_bounds = array<i64: 1>}, {transform_indices = @transform_9, window_bounds = array<i64: 1, 16>}]} {
    %c0 = arith.constant 0 : index
    %c0_0 = arith.constant 0 : index
    %0 = vector.load %arg1[%c0, %c0_0] : memref<16x32xbf16, #tpu.memory_space<vmem>>, vector<16x32xbf16>
    %c0_1 = arith.constant 0 : index
    %c0_2 = arith.constant 0 : index
    %1 = vector.load %arg3[%c0_1, %c0_2] : memref<32x32xbf16, #tpu.memory_space<vmem>>, vector<32x32xbf16>
    %cst = arith.constant dense<0.000000e+00> : vector<16x32xf32>
    %2 = tpu.matmul %0, %1, %cst {dimension_numbers = #tpu.dot_dimension_numbers<[1], [0], [0], [1], [0, 0, 1, 1], [], []>} : vector<16x32xbf16>, vector<32x32xbf16>, vector<16x32xf32> -> vector<16x32xf32>
    %c0_3 = arith.constant 0 : index
    %c0_4 = arith.constant 0 : index
    %3 = vector.load %arg2[%c0_3, %c0_4] : memref<16x2xf32, #tpu.memory_space<vmem>>, vector<16x2xf32>
    %c0_5 = arith.constant 0 : index
    %c0_6 = arith.constant 0 : index
    %4 = vector.load %arg4[%c0_5, %c0_6] : memref<2x32xf32, #tpu.memory_space<vmem>>, vector<2x32xf32>
    %c0_7 = arith.constant 0 : index
    %c0_8 = arith.constant 0 : index
    %5 = vector.load %arg5[%c0_7, %c0_8] : memref<1x32xf32, #tpu.memory_space<vmem>>, vector<1x32xf32>
    %6 = vector.extract_strided_slice %3 {offsets = [0, 0], sizes = [16, 1], strides = [1, 1]} : vector<16x2xf32> to vector<16x1xf32>
    %7 = vector.extract_strided_slice %4 {offsets = [0, 0], sizes = [1, 32], strides = [1, 1]} : vector<2x32xf32> to vector<1x32xf32>
    %8 = vector.broadcast %6 : vector<16x1xf32> to vector<16x32xf32>
    %9 = vector.broadcast %7 : vector<1x32xf32> to vector<16x32xf32>
    %10 = arith.mulf %8, %9 : vector<16x32xf32>
    %11 = vector.broadcast %5 : vector<1x32xf32> to vector<16x32xf32>
    %12 = arith.addf %11, %10 : vector<16x32xf32>
    %13 = vector.extract_strided_slice %3 {offsets = [0, 1], sizes = [16, 1], strides = [1, 1]} : vector<16x2xf32> to vector<16x1xf32>
    %14 = vector.extract_strided_slice %4 {offsets = [1, 0], sizes = [1, 32], strides = [1, 1]} : vector<2x32xf32> to vector<1x32xf32>
    %15 = vector.broadcast %13 : vector<16x1xf32> to vector<16x32xf32>
    %16 = vector.broadcast %14 : vector<1x32xf32> to vector<16x32xf32>
    %17 = arith.mulf %15, %16 : vector<16x32xf32>
    %18 = arith.addf %12, %17 : vector<16x32xf32>
    %19 = arith.addf %2, %18 : vector<16x32xf32>
    %cst_9 = arith.constant 5.000000e-01 : f32
    %20 = vector.broadcast %cst_9 : f32 to vector<16x32xf32>
    %21 = arith.mulf %20, %19 : vector<16x32xf32>
    %22 = math.tanh %21 : vector<16x32xf32>
    %cst_10 = arith.constant 5.000000e-01 : f32
    %23 = vector.broadcast %cst_10 : f32 to vector<16x32xf32>
    %24 = arith.mulf %23, %22 : vector<16x32xf32>
    %cst_11 = arith.constant 5.000000e-01 : f32
    %25 = vector.broadcast %cst_11 : f32 to vector<16x32xf32>
    %26 = arith.addf %24, %25 : vector<16x32xf32>
    %27 = arith.mulf %19, %26 : vector<16x32xf32>
    %28 = arith.truncf %27 : vector<16x32xf32> to vector<16x32xbf16>
    %c0_12 = arith.constant 0 : index
    %c0_13 = arith.constant 0 : index
    %29 = vector.load %arg6[%c0_12, %c0_13] : memref<32x16xbf16, #tpu.memory_space<vmem>>, vector<32x16xbf16>
    %cst_14 = arith.constant dense<0.000000e+00> : vector<16x16xf32>
    %30 = tpu.matmul %28, %29, %cst_14 {dimension_numbers = #tpu.dot_dimension_numbers<[1], [0], [0], [1], [0, 0, 1, 1], [], []>} : vector<16x32xbf16>, vector<32x16xbf16>, vector<16x16xf32> -> vector<16x16xf32>
    %c0_15 = arith.constant 0 : index
    %c0_16 = arith.constant 0 : index
    %31 = vector.load %arg7[%c0_15, %c0_16] : memref<1x16xf32, #tpu.memory_space<vmem>>, vector<1x16xf32>
    %32 = vector.broadcast %31 : vector<1x16xf32> to vector<16x16xf32>
    %33 = arith.addf %30, %32 : vector<16x16xf32>
    %cst_17 = arith.constant 5.000000e-01 : f32
    %34 = vector.broadcast %cst_17 : f32 to vector<16x16xf32>
    %35 = arith.mulf %34, %33 : vector<16x16xf32>
    %36 = math.tanh %35 : vector<16x16xf32>
    %cst_18 = arith.constant 5.000000e-01 : f32
    %37 = vector.broadcast %cst_18 : f32 to vector<16x16xf32>
    %38 = arith.mulf %37, %36 : vector<16x16xf32>
    %cst_19 = arith.constant 5.000000e-01 : f32
    %39 = vector.broadcast %cst_19 : f32 to vector<16x16xf32>
    %40 = arith.addf %38, %39 : vector<16x16xf32>
    %41 = arith.mulf %33, %40 : vector<16x16xf32>
    %42 = arith.truncf %41 : vector<16x16xf32> to vector<16x16xbf16>
    %c0_20 = arith.constant 0 : index
    %c0_21 = arith.constant 0 : index
    %43 = vector.load %arg8[%c0_20, %c0_21] : memref<1x16xbf16, #tpu.memory_space<vmem>>, vector<1x16xbf16>
    %cst_22 = arith.constant dense<0.000000e+00> : vector<1x16xf32>
    %44 = tpu.matmul %43, %42, %cst_22 {dimension_numbers = #tpu.dot_dimension_numbers<[1], [1], [0], [0], [0, 0, 1, 0], [], []>} : vector<1x16xbf16>, vector<16x16xbf16>, vector<1x16xf32> -> vector<1x16xf32>
    %c0_23 = arith.constant 0 : index
    %45 = memref.load %arg9[%c0_23] : memref<1xf32, #tpu.memory_space<smem>>
    %46 = vector.broadcast %45 : f32 to vector<1x16xf32>
    %47 = arith.addf %44, %46 : vector<1x16xf32>
    %c0_24 = arith.constant 0 : index
    %c0_25 = arith.constant 0 : index
    %48 = vector.load %arg10[%c0_24, %c0_25] : memref<1x16xf32, #tpu.memory_space<vmem>>, vector<1x16xf32>
    tpu.vector_store %arg10[%c0_24, %c0_25], %47 {strides = array<i32>} : memref<1x16xf32, #tpu.memory_space<vmem>>, vector<1x16xf32>,
    return
  }
  func.func @transform_0(%arg0: i32) -> (i32, i32) {
    %c0_i32 = arith.constant 0 : i32
    %c0_i32_0 = arith.constant 0 : i32
    return %arg0, %c0_i32 : i32, i32
  }
  func.func @transform_1(%arg0: i32) -> (i32, i32) {
    %c0_i32 = arith.constant 0 : i32
    %c0_i32_0 = arith.constant 0 : i32
    return %arg0, %c0_i32 : i32, i32
  }
  func.func @transform_2(%arg0: i32) -> (i32, i32) {
    %c0_i32 = arith.constant 0 : i32
    %c0_i32_0 = arith.constant 0 : i32
    %c0_i32_1 = arith.constant 0 : i32
    return %c0_i32, %c0_i32_0 : i32, i32
  }
  func.func @transform_3(%arg0: i32) -> (i32, i32) {
    %c0_i32 = arith.constant 0 : i32
    %c0_i32_0 = arith.constant 0 : i32
    %c0_i32_1 = arith.constant 0 : i32
    return %c0_i32, %c0_i32_0 : i32, i32
  }
  func.func @transform_4(%arg0: i32) -> (i32, i32) {
    %c0_i32 = arith.constant 0 : i32
    %c0_i32_0 = arith.constant 0 : i32
    %c0_i32_1 = arith.constant 0 : i32
    return %c0_i32, %c0_i32_0 : i32, i32
  }
  func.func @transform_5(%arg0: i32) -> (i32, i32) {
    %c0_i32 = arith.constant 0 : i32
    %c0_i32_0 = arith.constant 0 : i32
    %c0_i32_1 = arith.constant 0 : i32
    return %c0_i32, %c0_i32_0 : i32, i32
  }
  func.func @transform_6(%arg0: i32) -> (i32, i32) {
    %c0_i32 = arith.constant 0 : i32
    %c0_i32_0 = arith.constant 0 : i32
    %c0_i32_1 = arith.constant 0 : i32
    return %c0_i32, %c0_i32_0 : i32, i32
  }
  func.func @transform_7(%arg0: i32) -> (i32, i32) {
    %c0_i32 = arith.constant 0 : i32
    %c0_i32_0 = arith.constant 0 : i32
    %c0_i32_1 = arith.constant 0 : i32
    return %c0_i32, %c0_i32_0 : i32, i32
  }
  func.func @transform_8(%arg0: i32) -> i32 {
    %c0_i32 = arith.constant 0 : i32
    %c0_i32_0 = arith.constant 0 : i32
    return %c0_i32 : i32
  }
  func.func @transform_9(%arg0: i32) -> (i32, i32) {
    %c0_i32 = arith.constant 0 : i32
    %c0_i32_0 = arith.constant 0 : i32
    return %c0_i32, %arg0 : i32, i32
  }
}

</mosaic_0001>

<llo_original>
// kernel: tpu_custom_call.1
$region0: #{tpu_custom_call.1}
  #allocation0 [shape = 'u32[]', space=smem, size = 0x4, offset = 0x4, fixed_abs, tag = 'smem constant byte address 0x4 - core index']
  #allocation1 [shape = 'u32[144,128]{1,0:T(1,128)}', space=vmem, size = 0x12000, scoped, tag = 'internal scratch']
  #allocation2 [shape = 'f32[1]{0:T(128)S(6)}', space=smem, size = 0x200, scoped, tag = 'scoped memory for tpu_custom_call.1']
  %s0 = inlined_call_operand.vmem [shape: bf16[16,32], index: 0, kind: input, shape index: {}]
  %s1 = inlined_call_operand.vmem [shape: f32[16,2], index: 1, kind: input, shape index: {}]
  %s2 = inlined_call_operand.vmem [shape: bf16[32,32], index: 2, kind: input, shape index: {}]
  %s3 = inlined_call_operand.vmem [shape: f32[2,32], index: 3, kind: input, shape index: {}]
  %s4 = inlined_call_operand.vmem [shape: f32[1,32], index: 4, kind: input, shape index: {}]
  %s5 = inlined_call_operand.vmem [shape: bf16[32,16], index: 5, kind: input, shape index: {}]
  %s6 = inlined_call_operand.vmem [shape: f32[1,16], index: 6, kind: input, shape index: {}]
  %s7 = inlined_call_operand.vmem [shape: bf16[1,16], index: 7, kind: input, shape index: {}]
  %s8 = inlined_call_operand.<no memory space> [shape: f32[1], index: 8, kind: input, shape index: {}]
  %s9 = inlined_call_operand.hbm [shape: f32[1,16], index: 9, kind: output, shape index: {}]
  %s10 = sld [smem:[#allocation0]]
  $region46: #{tpu_custom_call.1} parent=0
    _
  %s12 = ssub.s32 1, %s10
  %s13 = scalar_select 0, %s12, %s10
  %14 = sst [smem:[#allocation2]] %s8
  $region1: #{tpu_custom_call.1} parent=0
    #allocation3 [shape = 'u8[512]{0}', space=vmem, size = 0x400, scoped, tag = 'output window, operand 0, single buffered']
    #allocation4 [shape = 's32[1]{0}', space=sflag, size = 0x4, scoped, tag = 'scoped memory for tpu_custom_call.1']
    %15 = vsyncpa [#allocation4], 0
    // Predicated region
    $region2: #{tpu_custom_call.1} parent=1 // pred_check
      _
    $region3: #{tpu_custom_call.1} parent=1 // pred_check_branch
      %17 = sbr.rel (0) target = $region5
    $region4: #{tpu_custom_call.1} parent=1 // pred_region
      _
    $region5: #{tpu_custom_call.1} parent=1 // pred_fallthru
      _
    // Predicated region
    $region6: #{tpu_custom_call.1} parent=1 // pred_check
      _
    $region7: #{tpu_custom_call.1} parent=1 // pred_check_branch
      %19 = sbr.rel (0) target = $region9
    $region8: #{tpu_custom_call.1} parent=1 // pred_region
      _
    $region9: #{tpu_custom_call.1} parent=1 // pred_fallthru
      _
    // Predicated region
    $region10: #{tpu_custom_call.1} parent=1 // pred_check
      _
    $region11: #{tpu_custom_call.1} parent=1 // pred_check_branch
      %21 = sbr.rel (0) target = $region13
    $region12: #{tpu_custom_call.1} parent=1 // pred_region
      _
    $region13: #{tpu_custom_call.1} parent=1 // pred_fallthru
      _
    // Predicated region
    $region14: #{tpu_custom_call.1} parent=1 // pred_check
      _
    $region15: #{tpu_custom_call.1} parent=1 // pred_check_branch
      %23 = sbr.rel (0) target = $region17
    $region16: #{tpu_custom_call.1} parent=1 // pred_region
      _
    $region17: #{tpu_custom_call.1} parent=1 // pred_fallthru
      _
    // Predicated region
    $region18: #{tpu_custom_call.1} parent=1 // pred_check
      _
    $region19: #{tpu_custom_call.1} parent=1 // pred_check_branch
      %25 = sbr.rel (0) target = $region21
    $region20: #{tpu_custom_call.1} parent=1 // pred_region
      _
    $region21: #{tpu_custom_call.1} parent=1 // pred_fallthru
      _
    // Predicated region
    $region22: #{tpu_custom_call.1} parent=1 // pred_check
      _
    $region23: #{tpu_custom_call.1} parent=1 // pred_check_branch
      %27 = sbr.rel (0) target = $region25
    $region24: #{tpu_custom_call.1} parent=1 // pred_region
      _
    $region25: #{tpu_custom_call.1} parent=1 // pred_fallthru
      _
    // Predicated region
    $region26: #{tpu_custom_call.1} parent=1 // pred_check
      _
    $region27: #{tpu_custom_call.1} parent=1 // pred_check_branch
      %29 = sbr.rel (0) target = $region29
    $region28: #{tpu_custom_call.1} parent=1 // pred_region
      _
    $region29: #{tpu_custom_call.1} parent=1 // pred_fallthru
      _
    // Predicated region
    $region30: #{tpu_custom_call.1} parent=1 // pred_check
      _
    $region31: #{tpu_custom_call.1} parent=1 // pred_check_branch
      %31 = sbr.rel (0) target = $region33
    $region32: #{tpu_custom_call.1} parent=1 // pred_region
      _
    $region33: #{tpu_custom_call.1} parent=1 // pred_fallthru
      _
    // Predicated region
    $region34: #{tpu_custom_call.1} parent=1 // pred_check
      _
    $region35: #{tpu_custom_call.1} parent=1 // pred_check_branch
      %33 = sbr.rel (0) target = $region37
    $region36: #{tpu_custom_call.1} parent=1 // pred_region
      _
    $region37: #{tpu_custom_call.1} parent=1 // pred_fallthru
      _
    %v35 = vld [vmem:[%s0] sm:$0xf]
    %v36 = vld [vmem:[%s0 + $0x4] sm:$0xf]
    %v37 = vld [vmem:[%s2] sm:$0xf]
    %v38 = vld [vmem:[%s2 + $0x4] sm:$0xf]
    %v39 = vld [vmem:[%s2 + $0x8] sm:$0xf]
    %v40 = vld [vmem:[%s2 + $0xc] sm:$0xf]
    %v41 = vld [vmem:[%s1] sm:$0xff]
    %v42 = vld [vmem:[%s1 + $0x8] sm:$0xff]
    %v43 = vld [vmem:[%s3] sm:$0x3]
    %v44 = vld [vmem:[%s4] sm:$0x1]
    %46 = vset.pattern.permute.xlu0 0
    %47 = vperm.xlu0 %46, %v41
    %v48 = vpop.permute.xlu0 %47
    %51 = vset.pattern.permute.xlu0 0
    %52 = vperm.xlu0 %51, %v42
    %v53 = vpop.permute.xlu0 %52
    %v55 = vlaneseq
    %v56 = vshrl.u32 %v55, 7
    %v57 = vsub.s32 0, %v56
    %v58 = vrot.slane %v43, %v57
    %v59 = vmul.f32 %v48, %v58
    %v60 = vmul.f32 %v53, %v58
    %v62 = vlaneseq
    %v63 = vshrl.u32 %v62, 7
    %v64 = vsub.s32 0, %v63
    %v65 = vrot.slane %v44, %v64
    %v67 = vadd.f32 %v65, %v59
    %v68 = vadd.f32 %v65, %v60
    %69 = vset.pattern.permute.xlu0 1
    %70 = vperm.xlu0 %69, %v41
    %v71 = vpop.permute.xlu0 %70
    %73 = vset.pattern.permute.xlu0 1
    %74 = vperm.xlu0 %73, %v42
    %v75 = vpop.permute.xlu0 %74
    %v77 = vlaneseq
    %v78 = vshrl.u32 %v77, 7
    %v79 = vsub.s32 1, %v78
    %v80 = vrot.slane %v43, %v79
    %v81 = vmul.f32 %v71, %v80
    %v82 = vmul.f32 %v75, %v80
    %v83 = vadd.f32 %v67, %v81
    %v84 = vadd.f32 %v68, %v82
    %v87 = vunpack.c.l.b16 %v35
    %v88 = vunpack.c.l.b16 %v36
    %v89 = vpack.c.b16 %v88, %v87
    %v94 = vunpack.c.l.b16 %v37
    %v95 = vunpack.c.l.b16 %v38
    %v96 = vunpack.c.l.b16 %v39
    %v97 = vunpack.c.l.b16 %v40
    %v98 = vpack.c.b16 %v95, %v94
    %v99 = vpack.c.b16 %v97, %v96
    %vm102 = vcmask 261120
    %v104 = vsel %vm102, %v89, 0
    %106 = vmatprep.subr.bf16.mxu0 0
    %107 = vmatpush1.bf16.msra.mxu0 0
    %108 = vmatprep.subr.bf16.mxu0 0
    %109 = vmatpush1.bf16.msra.mxu0 0
    %110 = vmatprep.subr.bf16.mxu0 0
    %111 = vmatpush1.bf16.msra.mxu0 0
    %112 = vmatprep.subr.bf16.mxu0 0
    %113 = vmatpush1.bf16.msra.mxu0 0
    %114 = vmatprep.subr.bf16.mxu0 0
    %115 = vmatpush1.bf16.msra.mxu0 0
    %116 = vmatprep.subr.bf16.mxu0 0
    %117 = vmatpush1.bf16.msra.mxu0 0
    %118 = vmatprep.subr.bf16.mxu0 0
    %119 = vmatpush1.bf16.msra.mxu0 %v99
    %120 = vmatprep.subr.bf16.mxu0 0
    %121 = vmatpush1.bf16.msra.mxu0 %v98
    %122 = vmatprep.subr.bf16.mxu0 0
    %123 = vmatpush2.bf16.msra.mxu0 0
    %124 = vmatprep.subr.bf16.mxu0 0
    %125 = vmatpush2.bf16.msra.mxu0 0
    %126 = vmatprep.subr.bf16.mxu0 0
    %127 = vmatpush2.bf16.msra.mxu0 0
    %128 = vmatprep.subr.bf16.mxu0 0
    %129 = vmatpush2.bf16.msra.mxu0 0
    %130 = vmatprep.subr.bf16.mxu0 0
    %131 = vmatpush2.bf16.msra.mxu0 0
    %132 = vmatprep.subr.bf16.mxu0 0
    %133 = vmatpush2.bf16.msra.mxu0 0
    %134 = vmatprep.subr.bf16.mxu0 0
    %135 = vmatpush2.bf16.msra.mxu0 0
    %136 = vmatprep.subr.bf16.mxu0 0
    %137 = vmatpush2.bf16.msra.mxu0 0
    %138 = vmatprep.mubr.bf16.mxu0 0
    %139 = vmatmul.mubr.bf16.gmra.mxu0 %v104
    %v140 = vpop.f32.mrf.mxu0
    %v141 = vadd.f32 %v83, %v140
    %v142 = vpop.f32.mrf.mxu0
    %v143 = vpop.f32.mrf.mxu0
    %v144 = vadd.f32 %v84, %v143
    %v145 = vpop.f32.mrf.mxu0
    %146 = vdwg.mxu0
    %v147 = vmul.f32 %v141, 0.5
    %v148 = vmul.f32 %v144, 0.5
    %v149 = vtanh.pop %v147
    %v150 = vtanh.pop %v148
    %v151 = vmul.f32 %v149, 0.5
    %v152 = vmul.f32 %v150, 0.5
    %v153 = vadd.f32 %v151, 0.5
    %v154 = vadd.f32 %v152, 0.5
    %v155 = vmul.f32 %v141, %v153
    %v156 = vmul.f32 %v144, %v154
    %v157 = vpack.c.bf16 %v156, %v155
    %v158 = vld [vmem:[%s5] sm:$0xf]
    %v159 = vld [vmem:[%s5 + $0x4] sm:$0xf]
    %v160 = vld [vmem:[%s5 + $0x8] sm:$0xf]
    %v161 = vld [vmem:[%s5 + $0xc] sm:$0xf]
    %v162 = vld [vmem:[%s6] sm:$0x1]
    %v164 = vlaneseq
    %v165 = vshrl.u32 %v164, 7
    %v166 = vsub.s32 0, %v165
    %v167 = vrot.slane %v162, %v166
    %v173 = vunpack.c.l.b16 %v158
    %v174 = vunpack.c.l.b16 %v159
    %v175 = vunpack.c.l.b16 %v160
    %v176 = vunpack.c.l.b16 %v161
    %v177 = vpack.c.b16 %v174, %v173
    %v178 = vpack.c.b16 %v176, %v175
    %v182 = vsel %vm102, %v157, 0
    %184 = vmatprep.subr.bf16.mxu0 0
    %185 = vmatpush1.bf16.msra.mxu0 0
    %186 = vmatprep.subr.bf16.mxu0 0
    %187 = vmatpush1.bf16.msra.mxu0 0
    %188 = vmatprep.subr.bf16.mxu0 0
    %189 = vmatpush1.bf16.msra.mxu0 0
    %190 = vmatprep.subr.bf16.mxu0 0
    %191 = vmatpush1.bf16.msra.mxu0 0
    %192 = vmatprep.subr.bf16.mxu0 0
    %193 = vmatpush1.bf16.msra.mxu0 0
    %194 = vmatprep.subr.bf16.mxu0 0
    %195 = vmatpush1.bf16.msra.mxu0 0
    %196 = vmatprep.subr.bf16.mxu0 0
    %197 = vmatpush1.bf16.msra.mxu0 %v178
    %198 = vmatprep.subr.bf16.mxu0 0
    %199 = vmatpush1.bf16.msra.mxu0 %v177
    %200 = vmatprep.subr.bf16.mxu0 0
    %201 = vmatpush2.bf16.msra.mxu0 0
    %202 = vmatprep.subr.bf16.mxu0 0
    %203 = vmatpush2.bf16.msra.mxu0 0
    %204 = vmatprep.subr.bf16.mxu0 0
    %205 = vmatpush2.bf16.msra.mxu0 0
    %206 = vmatprep.subr.bf16.mxu0 0
    %207 = vmatpush2.bf16.msra.mxu0 0
    %208 = vmatprep.subr.bf16.mxu0 0
    %209 = vmatpush2.bf16.msra.mxu0 0
    %210 = vmatprep.subr.bf16.mxu0 0
    %211 = vmatpush2.bf16.msra.mxu0 0
    %212 = vmatprep.subr.bf16.mxu0 0
    %213 = vmatpush2.bf16.msra.mxu0 0
    %214 = vmatprep.subr.bf16.mxu0 0
    %215 = vmatpush2.bf16.msra.mxu0 0
    %216 = vmatprep.mubr.bf16.mxu0 0
    %217 = vmatmul.mubr.bf16.gmra.mxu0 %v182
    %v218 = vpop.f32.mrf.mxu0
    %v219 = vadd.f32 %v167, %v218
    %v220 = vpop.f32.mrf.mxu0
    %v221 = vpop.f32.mrf.mxu0
    %v222 = vadd.f32 %v167, %v221
    %v223 = vpop.f32.mrf.mxu0
    %224 = vdwg.mxu0
    %v225 = vmul.f32 %v219, 0.5
    %v226 = vmul.f32 %v222, 0.5
    %v227 = vtanh.pop %v225
    %v228 = vtanh.pop %v226
    %v229 = vmul.f32 %v227, 0.5
    %v230 = vmul.f32 %v228, 0.5
    %v231 = vadd.f32 %v229, 0.5
    %v232 = vadd.f32 %v230, 0.5
    %v233 = vmul.f32 %v219, %v231
    %v234 = vmul.f32 %v222, %v232
    %v235 = vpack.c.bf16 %v234, %v233
    %v236 = vld [vmem:[%s7] sm:$0x1]
    %s237 = sld [smem:[#allocation2]]
    %v238 = vstv %s237
    %vm239 = vcmask 130048
    %v241 = vsel %vm239, %v236, 0
    %v244 = vsel %vm239, %v235, 0
    %246 = vmatprep.subr.bf16.mxu0 0
    %247 = vmatpush1.bf16.xpose.msra.mxu0 0
    %248 = vmatprep.subr.bf16.mxu0 0
    %249 = vmatpush1.bf16.xpose.msra.mxu0 0
    %250 = vmatprep.subr.bf16.mxu0 0
    %251 = vmatpush1.bf16.xpose.msra.mxu0 0
    %252 = vmatprep.subr.bf16.mxu0 0
    %253 = vmatpush1.bf16.xpose.msra.mxu0 0
    %254 = vmatprep.subr.bf16.mxu0 0
    %255 = vmatpush1.bf16.xpose.msra.mxu0 0
    %256 = vmatprep.subr.bf16.mxu0 0
    %257 = vmatpush1.bf16.xpose.msra.mxu0 0
    %258 = vmatprep.subr.bf16.mxu0 0
    %259 = vmatpush1.bf16.xpose.msra.mxu0 0
    %260 = vmatprep.subr.bf16.mxu0 0
    %261 = vmatpush1.bf16.xpose.msra.mxu0 %v244
    %262 = vmatprep.subr.bf16.mxu0 0
    %263 = vmatpush2.bf16.xpose.msra.mxu0 0
    %264 = vmatprep.subr.bf16.mxu0 0
    %265 = vmatpush2.bf16.xpose.msra.mxu0 0
    %266 = vmatprep.subr.bf16.mxu0 0
    %267 = vmatpush2.bf16.xpose.msra.mxu0 0
    %268 = vmatprep.subr.bf16.mxu0 0
    %269 = vmatpush2.bf16.xpose.msra.mxu0 0
    %270 = vmatprep.subr.bf16.mxu0 0
    %271 = vmatpush2.bf16.xpose.msra.mxu0 0
    %272 = vmatprep.subr.bf16.mxu0 0
    %273 = vmatpush2.bf16.xpose.msra.mxu0 0
    %274 = vmatprep.subr.bf16.mxu0 0
    %275 = vmatpush2.bf16.xpose.msra.mxu0 0
    %276 = vmatprep.subr.bf16.mxu0 0
    %277 = vmatpush2.bf16.xpose.msra.mxu0 0
    %278 = vmatprep.mubr.bf16.mxu0 0
    %279 = vmatmul.mubr.bf16.gmra.mxu0 %v241
    %v280 = vpop.f32.mrf.mxu0
    %v281 = vadd.f32 %v238, %v280
    %v282 = vpop.f32.mrf.mxu0
    %v283 = vpop.f32.mrf.mxu0
    %v284 = vpop.f32.mrf.mxu0
    %285 = vdwg.mxu0
    %vm286 = vcmask 122880
    %287 = vst.msk [vmem:[#allocation3] sm:$0x1] %vm286, %v281
    // Predicated region
    $region38: #{tpu_custom_call.1} parent=1 // pred_check
      _
    $region39: #{tpu_custom_call.1} parent=1 // pred_check_branch
      %289 = sbr.rel (0) target = $region41
    $region40: #{tpu_custom_call.1} parent=1 // pred_region
      %s291 = ssub.s32 16, 16
      %292 = vsyncadd [#allocation4], %s291
      %s294 = sshll.u32 [#allocation3], 4
      %s295 = int_to_ptr.vmem [resolvable:$true] %s294
      %297 = dma.vmem_to_hbm [thread:$0]  %s295, 16, %s9, [#allocation4]
    $region41: #{tpu_custom_call.1} parent=1 // pred_fallthru
      _
    // Predicated region
    $region42: #{tpu_custom_call.1} parent=1 // pred_check
      _
    $region43: #{tpu_custom_call.1} parent=1 // pred_check_branch
      %299 = sbr.rel (0) target = $region45
    $region44: #{tpu_custom_call.1} parent=1 // pred_region
      %300 = dma.done [#allocation4], 16
    $region45: #{tpu_custom_call.1} parent=1 // pred_fallthru
      _
    %301 = vsyncpa [#allocation4], 1

</llo_original>
